<compile_context>
chip_gen: v7x
topology: tpu7x:2x2x1
jax: 0.10.0
libtpu: 0.0.40
codegen_flags: <defaults>
</compile_context>

<pallas_src>
import functools

import jax
import jax.numpy as jnp
from jax.experimental import pallas as pl
from jax.experimental.pallas import tpu as pltpu

_MiB = 1024 * 1024


def _round_up(x, m):
    return (x + m - 1) // m * m


# --------------------------------------------------------------------------- kernel
def mlp_kernel(x_ref, w1_ref, b1_ref, w2_ref, b2_ref, w3_ref, b3_ref, o_ref):
    # 3 matmuls on the MXU (f32 accumulate) + bias add / ReLU on the VPU in f32.
    x = x_ref[...]  # keep the caller's operand dtype (f32 or bf16) for the MXU

    h1 = jnp.dot(x, w1_ref[...], preferred_element_type=jnp.float32)
    h1 = jnp.maximum(h1 + b1_ref[...].astype(jnp.float32), 0.0)

    h2 = jnp.dot(h1.astype(w2_ref.dtype), w2_ref[...],
                 preferred_element_type=jnp.float32)
    h2 = jnp.maximum(h2 + b2_ref[...].astype(jnp.float32), 0.0)

    out = jnp.dot(h2.astype(w3_ref.dtype), w3_ref[...],
                  preferred_element_type=jnp.float32)
    out = out + b3_ref[...].astype(jnp.float32)
    o_ref[...] = out.astype(o_ref.dtype)


# ------------------------------------------------------------------- feature probes
@functools.cache
def _single_buffer_supported():
    """Probe whether this JAX build accepts pl.Buffered(1) on a pallas_call BlockSpec."""
    try:
        def _probe(x_ref, o_ref):
            o_ref[...] = x_ref[...] + 1.0

        fn = pl.pallas_call(
            _probe,
            out_shape=jax.ShapeDtypeStruct((16, 128), jnp.float32),
            grid=(2,),
            in_specs=[pl.BlockSpec((8, 128), lambda i: (0, 0),
                                   pipeline_mode=pl.Buffered(1))],
            out_specs=pl.BlockSpec((8, 128), lambda i: (i, 0)),
        )
        jax.jit(fn).lower(jnp.zeros((8, 128), jnp.float32)).compile()
        return True
    except Exception:
        return False


@functools.cache
def _num_tensorcores():
    """TensorCores per device: 2 on v3/v4/v5p/v7x (megacore), 1 on v5e/v6e."""
    try:
        kind = jax.devices()[0].device_kind.lower()
    except Exception:
        return 1
    if any(tag in kind for tag in ("v7", "v5p", "v4", "v3")):
        return 2
    return 1


# ------------------------------------------------------------------------- factory
def make_mlp_pallas(w1, b1, w2, b2, w3, b3, *, block_m=512,
                    vmem_cap_bytes=48 * _MiB):
    """Pad the MLP parameters once and return `apply(x) -> y`.

    w*: [in, out] (transpose of torch Linear weight); b*: [1, out] or [out].
    Pass bf16 x / weights on v5e/v6e/v7x for the native-MXU fast path; accumulation
    and the bias/ReLU epilogue stay in f32 inside the kernel.
    """
    b1 = jnp.reshape(b1, (1, -1))
    b2 = jnp.reshape(b2, (1, -1))
    b3 = jnp.reshape(b3, (1, -1))
    num_i, num_h = w1.shape
    num_o = w3.shape[1]

    # Lane-multiple padding. (For large models where dims already exceed 128, padding
    # K/N to 256 multiples fills the v6e/v7x 256x256 MXU even better.)
    Kp = _round_up(num_i, 128)
    Hp = _round_up(num_h, 128)
    Op = _round_up(num_o, 128)

    # Pad parameters ONCE (hoisted out of the per-call path). Zero padding is
    # value-preserving: padded input columns hit zero weight rows, padded hidden
    # columns get zero bias (ReLU(0)=0) and zero outgoing weight rows.
    w1p = jnp.zeros((Kp, Hp), w1.dtype).at[:num_i, :num_h].set(w1)
    b1p = jnp.zeros((1, Hp), b1.dtype).at[:, :num_h].set(b1)
    w2p = jnp.zeros((Hp, Hp), w2.dtype).at[:num_h, :num_h].set(w2)
    b2p = jnp.zeros((1, Hp), b2.dtype).at[:, :num_h].set(b2)
    w3p = jnp.zeros((Hp, Op), w3.dtype).at[:num_h, :num_o].set(w3)
    b3p = jnp.zeros((1, Op), b3.dtype).at[:, :num_o].set(b3)
    params = tuple(jax.block_until_ready(p)
                   for p in (w1p, b1p, w2p, b2p, w3p, b3p))

    # Single-buffer the VMEM-resident weights if supported (their block index never
    # changes, so double-buffering only wastes VMEM).
    single_buf = _single_buffer_supported()
    wbuf = 1 if single_buf else 2
    weight_kwargs = dict(pipeline_mode=pl.Buffered(1)) if single_buf else {}

    w_item = jnp.dtype(w1.dtype).itemsize
    b_item = jnp.dtype(b1.dtype).itemsize
    num_cores = _num_tensorcores()
    param_bytes = sum(int(p.size) * jnp.dtype(p.dtype).itemsize for p in params)
    flops_per_row = 2 * (Kp * Hp + Hp * Hp + Hp * Op)

    def apply_impl(x, w1p, b1p, w2p, b2p, w3p, b3p):
        B, in_features = x.shape
        if in_features != num_i:
            raise ValueError(f"expected {num_i} input features, got {in_features}")
        x_item = jnp.dtype(x.dtype).itemsize
        out_item = x_item

        # ---- tile-size selection ------------------------------------------------
        B8 = _round_up(B, 8)
        # One batch tile per TensorCore when possible (1 step v5e/v6e, 2 on v7x),
        # capped by block_m so large batches still pipeline activation DMA.
        tm = min(block_m, _round_up(pl.cdiv(B8, num_cores), 8))
        # Keep the tm x Hp f32 intermediates around vreg capacity (64 vregs ~ 256 KiB)
        # so h1/h2 don't spill to VMEM between the matmuls.
        spill_cap = max(8, (256 * 1024 // (Hp * 4)) // 8 * 8)
        tm = max(8, min(tm, spill_cap))

        def vmem_budget(t):
            act = 2 * t * Kp * x_item                 # double-buffered activation tile
            out = 2 * t * Op * out_item               # double-buffered output tile
            wts = wbuf * ((Kp * Hp + Hp * Hp + Hp * Op) * w_item
                          + (2 * Hp + Op) * b_item)   # resident weights/biases
            inter = 2 * t * Hp * 4 + t * Op * 4       # f32 h1/h2/out temporaries
            return act + out + wts + inter

        while vmem_budget(tm) > vmem_cap_bytes and tm > 8:
            tm = max(8, _round_up(tm // 2, 8))

        Bp = _round_up(B, tm)
        grid = (Bp // tm,)

        # Explicit VMEM budget; only raise the scoped limit when the default (~32 MiB)
        # would not suffice. Stay under v7x's 64 MiB physical VMEM.
        need = vmem_budget(tm)
        vmem_limit = None
        if need > 30 * _MiB:
            vmem_limit = min(int(need * 1.5) + 4 * _MiB, 60 * _MiB)

        # ---- per-call work: pad activations only --------------------------------
        xp = jnp.zeros((Bp, Kp), x.dtype).at[:B, :num_i].set(x)

        def resident(shape):
            return pl.BlockSpec(shape, lambda i: (0, 0), **weight_kwargs)

        bytes_accessed = int(xp.size * x_item + param_bytes + Bp * Op * out_item)
        flops = int(Bp * flops_per_row)

        out_p = pl.pallas_call(
            mlp_kernel,
            out_shape=jax.ShapeDtypeStruct((Bp, Op), x.dtype),
            grid=grid,
            in_specs=[
                pl.BlockSpec((tm, Kp), lambda i: (i, 0)),   # batch-tiled activations
                resident((Kp, Hp)), resident((1, Hp)),
                resident((Hp, Hp)), resident((1, Hp)),
                resident((Hp, Op)), resident((1, Op)),
            ],
            out_specs=pl.BlockSpec((tm, Op), lambda i: (i, 0)),
            compiler_params=pltpu.CompilerParams(
                dimension_semantics=("parallel",),  # shard batch tiles across TCs (v7x)
                vmem_limit_bytes=vmem_limit,
            ),
            cost_estimate=pl.CostEstimate(
                flops=flops, bytes_accessed=bytes_accessed, transcendentals=0),
        )(xp, w1p, b1p, w2p, b2p, w3p, b3p)

        return out_p[:B, :num_o]

    jitted = jax.jit(apply_impl)

    def apply(x):
        return jitted(x, *params)

    return apply


# ----------------------------------------------------------------------- reference
def mlp_reference(x, w1, b1, w2, b2, w3, b3):
    h1 = jnp.maximum(x @ w1 + b1, 0.0)
    h2 = jnp.maximum(h1 @ w2 + b2, 0.0)
    return h2 @ w3 + b3


if __name__ == "__main__":
    # Small shapes consistent with MLP(num_i, num_h, num_o).
    batch, num_i, num_h, num_o = 8, 32, 64, 16

    key = jax.random.PRNGKey(0)
    kx, k1, k2, k3, kb1, kb2, kb3 = jax.random.split(key, 7)

    x = jax.random.normal(kx, (batch, num_i), dtype=jnp.float32)

    # Deterministic synthetic parameters (PyTorch Linear shapes, stored transposed).
    w1 = jax.random.normal(k1, (num_i, num_h), dtype=jnp.float32) * 0.1
    b1 = jax.random.normal(kb1, (1, num_h), dtype=jnp.float32) * 0.1
    w2 = jax.random.normal(k2, (num_h, num_h), dtype=jnp.float32) * 0.1
    b2 = jax.random.normal(kb2, (1, num_h), dtype=jnp.float32) * 0.1
    w3 = jax.random.normal(k3, (num_h, num_o), dtype=jnp.float32) * 0.1
    b3 = jax.random.normal(kb3, (1, num_o), dtype=jnp.float32) * 0.1

    ref = mlp_reference(x, w1, b1, w2, b2, w3, b3)

    # f32 path: parameters are padded once in the factory and reused across calls.
    mlp = make_mlp_pallas(w1, b1, w2, b2, w3, b3)
    out = jax.block_until_ready(mlp(x))
    assert out.shape == (batch, num_o)
    assert jnp.allclose(out, ref, atol=1e-4, rtol=1e-4)

    # Larger batch: exercises the batch grid / multi-TensorCore sharding with the same
    # (already padded, VMEM-resident) weights — no per-call weight padding.
    big_batch = 512
    xb = jax.random.normal(kx, (big_batch, num_i), dtype=jnp.float32)
    out_b = jax.block_until_ready(mlp(xb))
    ref_b = mlp_reference(xb, w1, b1, w2, b2, w3, b3)
    assert out_b.shape == (big_batch, num_o)
    assert jnp.allclose(out_b, ref_b, atol=1e-4, rtol=1e-4)

    # bf16 operands (native MXU dtype on v5e/v6e/v7x): bf16 x / weights, f32 biases,
    # f32 accumulation and f32 bias/ReLU epilogue inside the kernel.
    mlp_bf16 = make_mlp_pallas(w1.astype(jnp.bfloat16), b1,
                               w2.astype(jnp.bfloat16), b2,
                               w3.astype(jnp.bfloat16), b3)
    out_bf16 = jax.block_until_ready(mlp_bf16(x.astype(jnp.bfloat16)))
    assert out_bf16.shape == (batch, num_o)
    assert jnp.allclose(out_bf16.astype(jnp.float32), ref, atol=1e-1, rtol=1e-1)

    print("KERNEL_OK")
</pallas_src>

<mosaic_0001>
module attributes {stable_mosaic.version = 11 : i64} {
  func.func @mlp_kernel(%arg0: i32, %arg1: memref<8x128xf32, #tpu.memory_space<vmem>>, %arg2: memref<128x128xf32, #tpu.memory_space<vmem>>, %arg3: memref<1x128xf32, #tpu.memory_space<vmem>>, %arg4: memref<128x128xf32, #tpu.memory_space<vmem>>, %arg5: memref<1x128xf32, #tpu.memory_space<vmem>>, %arg6: memref<128x128xf32, #tpu.memory_space<vmem>>, %arg7: memref<1x128xf32, #tpu.memory_space<vmem>>, %arg8: memref<8x128xf32, #tpu.memory_space<vmem>>) attributes {dimension_semantics = [#tpu.dimension_semantics<parallel>], iteration_bounds = array<i64: 1>, scalar_prefetch = 0 : i64, scratch_operands = 0 : i64, tpu.core_type = #tpu.core_type<tc>, window_params = [{transform_indices = @transform_0, window_bounds = array<i64: 8, 128>}, {pipeline_mode = #tpu.pipeline_mode<synchronous>, transform_indices = @transform_1, window_bounds = array<i64: 128, 128>}, {pipeline_mode = #tpu.pipeline_mode<synchronous>, transform_indices = @transform_2, window_bounds = array<i64: 1, 128>}, {pipeline_mode = #tpu.pipeline_mode<synchronous>, transform_indices = @transform_3, window_bounds = array<i64: 128, 128>}, {pipeline_mode = #tpu.pipeline_mode<synchronous>, transform_indices = @transform_4, window_bounds = array<i64: 1, 128>}, {pipeline_mode = #tpu.pipeline_mode<synchronous>, transform_indices = @transform_5, window_bounds = array<i64: 128, 128>}, {pipeline_mode = #tpu.pipeline_mode<synchronous>, transform_indices = @transform_6, window_bounds = array<i64: 1, 128>}, {transform_indices = @transform_7, window_bounds = array<i64: 8, 128>}]} {
    %c0 = arith.constant 0 : index
    %c0_0 = arith.constant 0 : index
    %0 = vector.load %arg1[%c0, %c0_0] : memref<8x128xf32, #tpu.memory_space<vmem>>, vector<8x128xf32>
    %c0_1 = arith.constant 0 : index
    %c0_2 = arith.constant 0 : index
    %1 = vector.load %arg2[%c0_1, %c0_2] : memref<128x128xf32, #tpu.memory_space<vmem>>, vector<128x128xf32>
    %cst = arith.constant dense<0.000000e+00> : vector<8x128xf32>
    %2 = tpu.matmul %0, %1, %cst {dimension_numbers = #tpu.dot_dimension_numbers<[1], [0], [0], [1], [0, 0, 1, 1], [], []>} : vector<8x128xf32>, vector<128x128xf32>, vector<8x128xf32> -> vector<8x128xf32>
    %c0_3 = arith.constant 0 : index
    %c0_4 = arith.constant 0 : index
    %3 = vector.load %arg3[%c0_3, %c0_4] : memref<1x128xf32, #tpu.memory_space<vmem>>, vector<1x128xf32>
    %4 = vector.broadcast %3 : vector<1x128xf32> to vector<8x128xf32>
    %5 = arith.addf %2, %4 : vector<8x128xf32>
    %cst_5 = arith.constant 0.000000e+00 : f32
    %6 = vector.broadcast %cst_5 : f32 to vector<8x128xf32>
    %7 = arith.maximumf %5, %6 : vector<8x128xf32>
    %c0_6 = arith.constant 0 : index
    %c0_7 = arith.constant 0 : index
    %8 = vector.load %arg4[%c0_6, %c0_7] : memref<128x128xf32, #tpu.memory_space<vmem>>, vector<128x128xf32>
    %cst_8 = arith.constant dense<0.000000e+00> : vector<8x128xf32>
    %9 = tpu.matmul %7, %8, %cst_8 {dimension_numbers = #tpu.dot_dimension_numbers<[1], [0], [0], [1], [0, 0, 1, 1], [], []>} : vector<8x128xf32>, vector<128x128xf32>, vector<8x128xf32> -> vector<8x128xf32>
    %c0_9 = arith.constant 0 : index
    %c0_10 = arith.constant 0 : index
    %10 = vector.load %arg5[%c0_9, %c0_10] : memref<1x128xf32, #tpu.memory_space<vmem>>, vector<1x128xf32>
    %11 = vector.broadcast %10 : vector<1x128xf32> to vector<8x128xf32>
    %12 = arith.addf %9, %11 : vector<8x128xf32>
    %cst_11 = arith.constant 0.000000e+00 : f32
    %13 = vector.broadcast %cst_11 : f32 to vector<8x128xf32>
    %14 = arith.maximumf %12, %13 : vector<8x128xf32>
    %c0_12 = arith.constant 0 : index
    %c0_13 = arith.constant 0 : index
    %15 = vector.load %arg6[%c0_12, %c0_13] : memref<128x128xf32, #tpu.memory_space<vmem>>, vector<128x128xf32>
    %cst_14 = arith.constant dense<0.000000e+00> : vector<8x128xf32>
    %16 = tpu.matmul %14, %15, %cst_14 {dimension_numbers = #tpu.dot_dimension_numbers<[1], [0], [0], [1], [0, 0, 1, 1], [], []>} : vector<8x128xf32>, vector<128x128xf32>, vector<8x128xf32> -> vector<8x128xf32>
    %c0_15 = arith.constant 0 : index
    %c0_16 = arith.constant 0 : index
    %17 = vector.load %arg7[%c0_15, %c0_16] : memref<1x128xf32, #tpu.memory_space<vmem>>, vector<1x128xf32>
    %18 = vector.broadcast %17 : vector<1x128xf32> to vector<8x128xf32>
    %19 = arith.addf %16, %18 : vector<8x128xf32>
    %c0_17 = arith.constant 0 : index
    %c0_18 = arith.constant 0 : index
    %20 = vector.load %arg8[%c0_17, %c0_18] : memref<8x128xf32, #tpu.memory_space<vmem>>, vector<8x128xf32>
    tpu.vector_store %arg8[%c0_17, %c0_18], %19 {strides = array<i32>} : memref<8x128xf32, #tpu.memory_space<vmem>>, vector<8x128xf32>,
    return
  }
  func.func @transform_0(%arg0: i32) -> (i32, i32) {
    %c0_i32 = arith.constant 0 : i32
    %c0_i32_0 = arith.constant 0 : i32
    return %arg0, %c0_i32 : i32, i32
  }
  func.func @transform_1(%arg0: i32) -> (i32, i32) {
    %c0_i32 = arith.constant 0 : i32
    %c0_i32_0 = arith.constant 0 : i32
    %c0_i32_1 = arith.constant 0 : i32
    return %c0_i32, %c0_i32_0 : i32, i32
  }
  func.func @transform_2(%arg0: i32) -> (i32, i32) {
    %c0_i32 = arith.constant 0 : i32
    %c0_i32_0 = arith.constant 0 : i32
    %c0_i32_1 = arith.constant 0 : i32
    return %c0_i32, %c0_i32_0 : i32, i32
  }
  func.func @transform_3(%arg0: i32) -> (i32, i32) {
    %c0_i32 = arith.constant 0 : i32
    %c0_i32_0 = arith.constant 0 : i32
    %c0_i32_1 = arith.constant 0 : i32
    return %c0_i32, %c0_i32_0 : i32, i32
  }
  func.func @transform_4(%arg0: i32) -> (i32, i32) {
    %c0_i32 = arith.constant 0 : i32
    %c0_i32_0 = arith.constant 0 : i32
    %c0_i32_1 = arith.constant 0 : i32
    return %c0_i32, %c0_i32_0 : i32, i32
  }
  func.func @transform_5(%arg0: i32) -> (i32, i32) {
    %c0_i32 = arith.constant 0 : i32
    %c0_i32_0 = arith.constant 0 : i32
    %c0_i32_1 = arith.constant 0 : i32
    return %c0_i32, %c0_i32_0 : i32, i32
  }
  func.func @transform_6(%arg0: i32) -> (i32, i32) {
    %c0_i32 = arith.constant 0 : i32
    %c0_i32_0 = arith.constant 0 : i32
    %c0_i32_1 = arith.constant 0 : i32
    return %c0_i32, %c0_i32_0 : i32, i32
  }
  func.func @transform_7(%arg0: i32) -> (i32, i32) {
    %c0_i32 = arith.constant 0 : i32
    %c0_i32_0 = arith.constant 0 : i32
    return %arg0, %c0_i32 : i32, i32
  }
}

</mosaic_0001>

<llo_original>
// kernel: apply_impl.1
$region0: #{apply_impl.1}
  #allocation0 [shape = 'u32[]', space=smem, size = 0x4, offset = 0x4, fixed_abs, tag = 'smem constant byte address 0x4 - core index']
  #allocation1 [shape = 'u32[144,128]{1,0:T(1,128)}', space=vmem, size = 0x12000, scoped, tag = 'internal scratch']
  %s0 = inlined_call_operand.vmem [shape: f32[8,128], index: 0, kind: input, shape index: {}]
  %s1 = inlined_call_operand.hbm [shape: f32[128,128], index: 1, kind: input, shape index: {}]
  %s2 = inlined_call_operand.vmem [shape: f32[1,128], index: 2, kind: input, shape index: {}]
  %s3 = inlined_call_operand.hbm [shape: f32[128,128], index: 3, kind: input, shape index: {}]
  %s4 = inlined_call_operand.vmem [shape: f32[1,128], index: 4, kind: input, shape index: {}]
  %s5 = inlined_call_operand.hbm [shape: f32[128,128], index: 5, kind: input, shape index: {}]
  %s6 = inlined_call_operand.vmem [shape: f32[1,128], index: 6, kind: input, shape index: {}]
  %s7 = inlined_call_operand.hbm [shape: f32[8,128], index: 7, kind: output, shape index: {}]
  %s8 = sld [smem:[#allocation0]]
  $region50: #{apply_impl.1} parent=0
    _
  %s10 = ssub.s32 1, %s8
  %s11 = scalar_select 0, %s10, %s8
  $region1: #{apply_impl.1} parent=0
    #allocation2 [shape = 'u8[65536]{0}', space=vmem, size = 0x10000, scoped, tag = 'input window, operand 1, single buffered']
    #allocation3 [shape = 's32[1]{0}', space=sflag, size = 0x4, scoped, tag = 'scoped memory for apply_impl.1']
    #allocation4 [shape = 's32[1]{0}', space=sflag, size = 0x4, scoped, tag = 'scoped memory for apply_impl.1']
    #allocation5 [shape = 'u8[65536]{0}', space=vmem, size = 0x10000, scoped, tag = 'input window, operand 3, single buffered']
    #allocation6 [shape = 's32[1]{0}', space=sflag, size = 0x4, scoped, tag = 'scoped memory for apply_impl.1']
    #allocation7 [shape = 'u8[65536]{0}', space=vmem, size = 0x10000, scoped, tag = 'input window, operand 5, single buffered']
    #allocation8 [shape = 'u8[4096]{0}', space=vmem, size = 0x1000, scoped, tag = 'output window, operand 0, single buffered']
    %12 = vsyncpa [#allocation3], 0
    %13 = vsyncpa [#allocation6], 0
    %14 = vsyncpa [#allocation4], 0
    // Predicated region
    $region2: #{apply_impl.1} parent=1 // pred_check
      _
    $region3: #{apply_impl.1} parent=1 // pred_check_branch
      %16 = sbr.rel (0) target = $region5
    $region4: #{apply_impl.1} parent=1 // pred_region
      _
    $region5: #{apply_impl.1} parent=1 // pred_fallthru
      _
    // Predicated region
    $region6: #{apply_impl.1} parent=1 // pred_check
      _
    $region7: #{apply_impl.1} parent=1 // pred_check_branch
      %18 = sbr.rel (0) target = $region9
    $region8: #{apply_impl.1} parent=1 // pred_region
      %s20 = ssub.s32 2048, 2048
      %21 = vsyncadd [#allocation3], %s20
      %s22 = sshll.u32 [#allocation2], 4
      %s23 = int_to_ptr.vmem [resolvable:$true] %s22
      %28 = dma.hbm_to_vmem [thread:$0]  %s1, 2048, %s23, [#allocation3], 128, 128, 8
    $region9: #{apply_impl.1} parent=1 // pred_fallthru
      _
    // Predicated region
    $region10: #{apply_impl.1} parent=1 // pred_check
      _
    $region11: #{apply_impl.1} parent=1 // pred_check_branch
      %30 = sbr.rel (0) target = $region13
    $region12: #{apply_impl.1} parent=1 // pred_region
      _
    $region13: #{apply_impl.1} parent=1 // pred_fallthru
      _
    // Predicated region
    $region14: #{apply_impl.1} parent=1 // pred_check
      _
    $region15: #{apply_impl.1} parent=1 // pred_check_branch
      %32 = sbr.rel (0) target = $region17
    $region16: #{apply_impl.1} parent=1 // pred_region
      %s34 = ssub.s32 2048, 2048
      %35 = vsyncadd [#allocation6], %s34
      %s36 = sshll.u32 [#allocation5], 4
      %s37 = int_to_ptr.vmem [resolvable:$true] %s36
      %42 = dma.hbm_to_vmem [thread:$0]  %s3, 2048, %s37, [#allocation6], 128, 128, 8
    $region17: #{apply_impl.1} parent=1 // pred_fallthru
      _
    // Predicated region
    $region18: #{apply_impl.1} parent=1 // pred_check
      _
    $region19: #{apply_impl.1} parent=1 // pred_check_branch
      %44 = sbr.rel (0) target = $region21
    $region20: #{apply_impl.1} parent=1 // pred_region
      _
    $region21: #{apply_impl.1} parent=1 // pred_fallthru
      _
    // Predicated region
    $region22: #{apply_impl.1} parent=1 // pred_check
      _
    $region23: #{apply_impl.1} parent=1 // pred_check_branch
      %46 = sbr.rel (0) target = $region25
    $region24: #{apply_impl.1} parent=1 // pred_region
      %s48 = ssub.s32 2048, 2048
      %49 = vsyncadd [#allocation6], %s48
      %s50 = sshll.u32 [#allocation7], 4
      %s51 = int_to_ptr.vmem [resolvable:$true] %s50
      %56 = dma.hbm_to_vmem [thread:$0]  %s5, 2048, %s51, [#allocation6], 128, 128, 8
    $region25: #{apply_impl.1} parent=1 // pred_fallthru
      _
    // Predicated region
    $region26: #{apply_impl.1} parent=1 // pred_check
      _
    $region27: #{apply_impl.1} parent=1 // pred_check_branch
      %58 = sbr.rel (0) target = $region29
    $region28: #{apply_impl.1} parent=1 // pred_region
      _
    $region29: #{apply_impl.1} parent=1 // pred_fallthru
      _
    // Predicated region
    $region30: #{apply_impl.1} parent=1 // pred_check
      _
    $region31: #{apply_impl.1} parent=1 // pred_check_branch
      %60 = sbr.rel (0) target = $region33
    $region32: #{apply_impl.1} parent=1 // pred_region
      %61 = dma.done [#allocation3], 2048
    $region33: #{apply_impl.1} parent=1 // pred_fallthru
      _
    // Predicated region
    $region34: #{apply_impl.1} parent=1 // pred_check
      _
    $region35: #{apply_impl.1} parent=1 // pred_check_branch
      %63 = sbr.rel (0) target = $region37
    $region36: #{apply_impl.1} parent=1 // pred_region
      %64 = dma.done [#allocation6], 2048
    $region37: #{apply_impl.1} parent=1 // pred_fallthru
      _
    // Predicated region
    $region38: #{apply_impl.1} parent=1 // pred_check
      _
    $region39: #{apply_impl.1} parent=1 // pred_check_branch
      %66 = sbr.rel (0) target = $region41
    $region40: #{apply_impl.1} parent=1 // pred_region
      %67 = dma.done [#allocation6], 2048
    $region41: #{apply_impl.1} parent=1 // pred_fallthru
      _
    %v68 = vld [vmem:[%s0] sm:$0xff]
    %v69 = vld [vmem:[#allocation2] sm:$0xff]
    %v70 = vld [vmem:[#allocation2 + $0x8] sm:$0xff]
    %v71 = vld [vmem:[#allocation2 + $0x10] sm:$0xff]
    %v72 = vld [vmem:[#allocation2 + $0x18] sm:$0xff]
    %v73 = vld [vmem:[#allocation2 + $0x20] sm:$0xff]
    %v74 = vld [vmem:[#allocation2 + $0x28] sm:$0xff]
    %v75 = vld [vmem:[#allocation2 + $0x30] sm:$0xff]
    %v76 = vld [vmem:[#allocation2 + $0x38] sm:$0xff]
    %v77 = vld [vmem:[#allocation2 + $0x40] sm:$0xff]
    %v78 = vld [vmem:[#allocation2 + $0x48] sm:$0xff]
    %v79 = vld [vmem:[#allocation2 + $0x50] sm:$0xff]
    %v80 = vld [vmem:[#allocation2 + $0x58] sm:$0xff]
    %v81 = vld [vmem:[#allocation2 + $0x60] sm:$0xff]
    %v82 = vld [vmem:[#allocation2 + $0x68] sm:$0xff]
    %v83 = vld [vmem:[#allocation2 + $0x70] sm:$0xff]
    %v84 = vld [vmem:[#allocation2 + $0x78] sm:$0xff]
    %v85 = vld [vmem:[%s2] sm:$0x1]
    %v87 = vlaneseq
    %v88 = vshrl.u32 %v87, 7
    %v89 = vsub.s32 0, %v88
    %v90 = vrot.slane %v85, %v89
    %92 = vmatprep.subr.mxu0 0.0
    %93 = vmatpush1.msra.mxu0 %v69
    %94 = vmatprep.subr.mxu0 0.0
    %95 = vmatpush1.msra.mxu0 %v70
    %96 = vmatprep.subr.mxu0 0.0
    %97 = vmatpush1.msra.mxu0 %v71
    %98 = vmatprep.subr.mxu0 0.0
    %99 = vmatpush1.msra.mxu0 %v72
    %100 = vmatprep.subr.mxu0 0.0
    %101 = vmatpush1.msra.mxu0 %v73
    %102 = vmatprep.subr.mxu0 0.0
    %103 = vmatpush1.msra.mxu0 %v74
    %104 = vmatprep.subr.mxu0 0.0
    %105 = vmatpush1.msra.mxu0 %v75
    %106 = vmatprep.subr.mxu0 0.0
    %107 = vmatpush1.msra.mxu0 %v76
    %108 = vmatprep.subr.mxu0 0.0
    %109 = vmatpush1.msra.mxu0 %v77
    %110 = vmatprep.subr.mxu0 0.0
    %111 = vmatpush1.msra.mxu0 %v78
    %112 = vmatprep.subr.mxu0 0.0
    %113 = vmatpush1.msra.mxu0 %v79
    %114 = vmatprep.subr.mxu0 0.0
    %115 = vmatpush1.msra.mxu0 %v80
    %116 = vmatprep.subr.mxu0 0.0
    %117 = vmatpush1.msra.mxu0 %v81
    %118 = vmatprep.subr.mxu0 0.0
    %119 = vmatpush1.msra.mxu0 %v82
    %120 = vmatprep.subr.mxu0 0.0
    %121 = vmatpush1.msra.mxu0 %v83
    %122 = vmatprep.subr.mxu0 0.0
    %123 = vmatpush1.msra.mxu0 %v84
    %124 = vmatprep.subr.mxu0 0.0
    %125 = vmatpush1.msra.mxu0 0.0
    %126 = vmatprep.subr.mxu0 0.0
    %127 = vmatpush1.msra.mxu0 0.0
    %128 = vmatprep.subr.mxu0 0.0
    %129 = vmatpush1.msra.mxu0 0.0
    %130 = vmatprep.subr.mxu0 0.0
    %131 = vmatpush1.msra.mxu0 0.0
    %132 = vmatprep.subr.mxu0 0.0
    %133 = vmatpush1.msra.mxu0 0.0
    %134 = vmatprep.subr.mxu0 0.0
    %135 = vmatpush1.msra.mxu0 0.0
    %136 = vmatprep.subr.mxu0 0.0
    %137 = vmatpush1.msra.mxu0 0.0
    %138 = vmatprep.subr.mxu0 0.0
    %139 = vmatpush1.msra.mxu0 0.0
    %140 = vmatprep.subr.mxu0 0.0
    %141 = vmatpush1.msra.mxu0 0.0
    %142 = vmatprep.subr.mxu0 0.0
    %143 = vmatpush1.msra.mxu0 0.0
    %144 = vmatprep.subr.mxu0 0.0
    %145 = vmatpush1.msra.mxu0 0.0
    %146 = vmatprep.subr.mxu0 0.0
    %147 = vmatpush1.msra.mxu0 0.0
    %148 = vmatprep.subr.mxu0 0.0
    %149 = vmatpush1.msra.mxu0 0.0
    %150 = vmatprep.subr.mxu0 0.0
    %151 = vmatpush1.msra.mxu0 0.0
    %152 = vmatprep.subr.mxu0 0.0
    %153 = vmatpush1.msra.mxu0 0.0
    %154 = vmatprep.subr.mxu0 0.0
    %155 = vmatpush1.msra.mxu0 0.0
    %156 = vmatprep.mubr.f32.mxu0 0.0
    %157 = vmatmul.mubr.f32.gmra.mrb[0].mxu0 %v68
    %v158 = vpop.f32.mrb[0].mxu0
    %v159 = vadd.f32 %v90, %v158
    %v160 = vpop.f32.mrb[0].mxu0
    %161 = vdwg.mxu0
    %v162 = vmax.f32 %v159, 0.0
    %v163 = vld [vmem:[#allocation5] sm:$0xff]
    %v164 = vld [vmem:[#allocation5 + $0x8] sm:$0xff]
    %v165 = vld [vmem:[#allocation5 + $0x10] sm:$0xff]
    %v166 = vld [vmem:[#allocation5 + $0x18] sm:$0xff]
    %v167 = vld [vmem:[#allocation5 + $0x20] sm:$0xff]
    %v168 = vld [vmem:[#allocation5 + $0x28] sm:$0xff]
    %v169 = vld [vmem:[#allocation5 + $0x30] sm:$0xff]
    %v170 = vld [vmem:[#allocation5 + $0x38] sm:$0xff]
    %v171 = vld [vmem:[#allocation5 + $0x40] sm:$0xff]
    %v172 = vld [vmem:[#allocation5 + $0x48] sm:$0xff]
    %v173 = vld [vmem:[#allocation5 + $0x50] sm:$0xff]
    %v174 = vld [vmem:[#allocation5 + $0x58] sm:$0xff]
    %v175 = vld [vmem:[#allocation5 + $0x60] sm:$0xff]
    %v176 = vld [vmem:[#allocation5 + $0x68] sm:$0xff]
    %v177 = vld [vmem:[#allocation5 + $0x70] sm:$0xff]
    %v178 = vld [vmem:[#allocation5 + $0x78] sm:$0xff]
    %v179 = vld [vmem:[%s4] sm:$0x1]
    %v181 = vlaneseq
    %v182 = vshrl.u32 %v181, 7
    %v183 = vsub.s32 0, %v182
    %v184 = vrot.slane %v179, %v183
    %186 = vmatprep.subr.mxu0 0.0
    %187 = vmatpush1.msra.mxu0 %v163
    %188 = vmatprep.subr.mxu0 0.0
    %189 = vmatpush1.msra.mxu0 %v164
    %190 = vmatprep.subr.mxu0 0.0
    %191 = vmatpush1.msra.mxu0 %v165
    %192 = vmatprep.subr.mxu0 0.0
    %193 = vmatpush1.msra.mxu0 %v166
    %194 = vmatprep.subr.mxu0 0.0
    %195 = vmatpush1.msra.mxu0 %v167
    %196 = vmatprep.subr.mxu0 0.0
    %197 = vmatpush1.msra.mxu0 %v168
    %198 = vmatprep.subr.mxu0 0.0
    %199 = vmatpush1.msra.mxu0 %v169
    %200 = vmatprep.subr.mxu0 0.0
    %201 = vmatpush1.msra.mxu0 %v170
    %202 = vmatprep.subr.mxu0 0.0
    %203 = vmatpush1.msra.mxu0 %v171
    %204 = vmatprep.subr.mxu0 0.0
    %205 = vmatpush1.msra.mxu0 %v172
    %206 = vmatprep.subr.mxu0 0.0
    %207 = vmatpush1.msra.mxu0 %v173
    %208 = vmatprep.subr.mxu0 0.0
    %209 = vmatpush1.msra.mxu0 %v174
    %210 = vmatprep.subr.mxu0 0.0
    %211 = vmatpush1.msra.mxu0 %v175
    %212 = vmatprep.subr.mxu0 0.0
    %213 = vmatpush1.msra.mxu0 %v176
    %214 = vmatprep.subr.mxu0 0.0
    %215 = vmatpush1.msra.mxu0 %v177
    %216 = vmatprep.subr.mxu0 0.0
    %217 = vmatpush1.msra.mxu0 %v178
    %218 = vmatprep.subr.mxu0 0.0
    %219 = vmatpush1.msra.mxu0 0.0
    %220 = vmatprep.subr.mxu0 0.0
    %221 = vmatpush1.msra.mxu0 0.0
    %222 = vmatprep.subr.mxu0 0.0
    %223 = vmatpush1.msra.mxu0 0.0
    %224 = vmatprep.subr.mxu0 0.0
    %225 = vmatpush1.msra.mxu0 0.0
    %226 = vmatprep.subr.mxu0 0.0
    %227 = vmatpush1.msra.mxu0 0.0
    %228 = vmatprep.subr.mxu0 0.0
    %229 = vmatpush1.msra.mxu0 0.0
    %230 = vmatprep.subr.mxu0 0.0
    %231 = vmatpush1.msra.mxu0 0.0
    %232 = vmatprep.subr.mxu0 0.0
    %233 = vmatpush1.msra.mxu0 0.0
    %234 = vmatprep.subr.mxu0 0.0
    %235 = vmatpush1.msra.mxu0 0.0
    %236 = vmatprep.subr.mxu0 0.0
    %237 = vmatpush1.msra.mxu0 0.0
    %238 = vmatprep.subr.mxu0 0.0
    %239 = vmatpush1.msra.mxu0 0.0
    %240 = vmatprep.subr.mxu0 0.0
    %241 = vmatpush1.msra.mxu0 0.0
    %242 = vmatprep.subr.mxu0 0.0
    %243 = vmatpush1.msra.mxu0 0.0
    %244 = vmatprep.subr.mxu0 0.0
    %245 = vmatpush1.msra.mxu0 0.0
    %246 = vmatprep.subr.mxu0 0.0
    %247 = vmatpush1.msra.mxu0 0.0
    %248 = vmatprep.subr.mxu0 0.0
    %249 = vmatpush1.msra.mxu0 0.0
    %250 = vmatprep.mubr.f32.mxu0 0.0
    %251 = vmatmul.mubr.f32.gmra.mrb[0].mxu0 %v162
    %v252 = vpop.f32.mrb[0].mxu0
    %v253 = vadd.f32 %v184, %v252
    %v254 = vpop.f32.mrb[0].mxu0
    %255 = vdwg.mxu0
    %v256 = vmax.f32 %v253, 0.0
    %v257 = vld [vmem:[#allocation7] sm:$0xff]
    %v258 = vld [vmem:[#allocation7 + $0x8] sm:$0xff]
    %v259 = vld [vmem:[#allocation7 + $0x10] sm:$0xff]
    %v260 = vld [vmem:[#allocation7 + $0x18] sm:$0xff]
    %v261 = vld [vmem:[#allocation7 + $0x20] sm:$0xff]
    %v262 = vld [vmem:[#allocation7 + $0x28] sm:$0xff]
    %v263 = vld [vmem:[#allocation7 + $0x30] sm:$0xff]
    %v264 = vld [vmem:[#allocation7 + $0x38] sm:$0xff]
    %v265 = vld [vmem:[#allocation7 + $0x40] sm:$0xff]
    %v266 = vld [vmem:[#allocation7 + $0x48] sm:$0xff]
    %v267 = vld [vmem:[#allocation7 + $0x50] sm:$0xff]
    %v268 = vld [vmem:[#allocation7 + $0x58] sm:$0xff]
    %v269 = vld [vmem:[#allocation7 + $0x60] sm:$0xff]
    %v270 = vld [vmem:[#allocation7 + $0x68] sm:$0xff]
    %v271 = vld [vmem:[#allocation7 + $0x70] sm:$0xff]
    %v272 = vld [vmem:[#allocation7 + $0x78] sm:$0xff]
    %v273 = vld [vmem:[%s6] sm:$0x1]
    %v275 = vlaneseq
    %v276 = vshrl.u32 %v275, 7
    %v277 = vsub.s32 0, %v276
    %v278 = vrot.slane %v273, %v277
    %280 = vmatprep.subr.mxu0 0.0
    %281 = vmatpush1.msra.mxu0 %v257
    %282 = vmatprep.subr.mxu0 0.0
    %283 = vmatpush1.msra.mxu0 %v258
    %284 = vmatprep.subr.mxu0 0.0
    %285 = vmatpush1.msra.mxu0 %v259
    %286 = vmatprep.subr.mxu0 0.0
    %287 = vmatpush1.msra.mxu0 %v260
    %288 = vmatprep.subr.mxu0 0.0
    %289 = vmatpush1.msra.mxu0 %v261
    %290 = vmatprep.subr.mxu0 0.0
    %291 = vmatpush1.msra.mxu0 %v262
    %292 = vmatprep.subr.mxu0 0.0
    %293 = vmatpush1.msra.mxu0 %v263
    %294 = vmatprep.subr.mxu0 0.0
    %295 = vmatpush1.msra.mxu0 %v264
    %296 = vmatprep.subr.mxu0 0.0
    %297 = vmatpush1.msra.mxu0 %v265
    %298 = vmatprep.subr.mxu0 0.0
    %299 = vmatpush1.msra.mxu0 %v266
    %300 = vmatprep.subr.mxu0 0.0
    %301 = vmatpush1.msra.mxu0 %v267
    %302 = vmatprep.subr.mxu0 0.0
    %303 = vmatpush1.msra.mxu0 %v268
    %304 = vmatprep.subr.mxu0 0.0
    %305 = vmatpush1.msra.mxu0 %v269
    %306 = vmatprep.subr.mxu0 0.0
    %307 = vmatpush1.msra.mxu0 %v270
    %308 = vmatprep.subr.mxu0 0.0
    %309 = vmatpush1.msra.mxu0 %v271
    %310 = vmatprep.subr.mxu0 0.0
    %311 = vmatpush1.msra.mxu0 %v272
    %312 = vmatprep.subr.mxu0 0.0
    %313 = vmatpush1.msra.mxu0 0.0
    %314 = vmatprep.subr.mxu0 0.0
    %315 = vmatpush1.msra.mxu0 0.0
    %316 = vmatprep.subr.mxu0 0.0
    %317 = vmatpush1.msra.mxu0 0.0
    %318 = vmatprep.subr.mxu0 0.0
    %319 = vmatpush1.msra.mxu0 0.0
    %320 = vmatprep.subr.mxu0 0.0
    %321 = vmatpush1.msra.mxu0 0.0
    %322 = vmatprep.subr.mxu0 0.0
    %323 = vmatpush1.msra.mxu0 0.0
    %324 = vmatprep.subr.mxu0 0.0
    %325 = vmatpush1.msra.mxu0 0.0
    %326 = vmatprep.subr.mxu0 0.0
    %327 = vmatpush1.msra.mxu0 0.0
    %328 = vmatprep.subr.mxu0 0.0
    %329 = vmatpush1.msra.mxu0 0.0
    %330 = vmatprep.subr.mxu0 0.0
    %331 = vmatpush1.msra.mxu0 0.0
    %332 = vmatprep.subr.mxu0 0.0
    %333 = vmatpush1.msra.mxu0 0.0
    %334 = vmatprep.subr.mxu0 0.0
    %335 = vmatpush1.msra.mxu0 0.0
    %336 = vmatprep.subr.mxu0 0.0
    %337 = vmatpush1.msra.mxu0 0.0
    %338 = vmatprep.subr.mxu0 0.0
    %339 = vmatpush1.msra.mxu0 0.0
    %340 = vmatprep.subr.mxu0 0.0
    %341 = vmatpush1.msra.mxu0 0.0
    %342 = vmatprep.subr.mxu0 0.0
    %343 = vmatpush1.msra.mxu0 0.0
    %344 = vmatprep.mubr.f32.mxu0 0.0
    %345 = vmatmul.mubr.f32.gmra.mrb[0].mxu0 %v256
    %v346 = vpop.f32.mrb[0].mxu0
    %v347 = vadd.f32 %v278, %v346
    %v348 = vpop.f32.mrb[0].mxu0
    %349 = vdwg.mxu0
    %350 = vst [vmem:[#allocation8] sm:$0xff] %v347
    // Predicated region
    $region42: #{apply_impl.1} parent=1 // pred_check
      _
    $region43: #{apply_impl.1} parent=1 // pred_check_branch
      %352 = sbr.rel (0) target = $region45
    $region44: #{apply_impl.1} parent=1 // pred_region
      %s354 = ssub.s32 128, 128
      %355 = vsyncadd [#allocation4], %s354
      %s357 = sshll.u32 [#allocation8], 4
      %s358 = int_to_ptr.vmem [resolvable:$true] %s357
      %360 = dma.vmem_to_hbm [thread:$0]  %s358, 128, %s7, [#allocation4]
    $region45: #{apply_impl.1} parent=1 // pred_fallthru
      _
    // Predicated region
    $region46: #{apply_impl.1} parent=1 // pred_check
      _
    $region47: #{apply_impl.1} parent=1 // pred_check_branch
      %362 = sbr.rel (0) target = $region49
    $region48: #{apply_impl.1} parent=1 // pred_region
      %363 = dma.done [#allocation4], 128
    $region49: #{apply_impl.1} parent=1 // pred_fallthru
      _
    %364 = vsyncpa [#allocation3], 1
    %365 = vsyncpa [#allocation6], 1
    %366 = vsyncpa [#allocation4], 1

</llo_original>
